<compile_context>
chip_gen: v7x
topology: tpu7x:2x2x1
jax: 0.10.0
libtpu: 0.0.40
codegen_flags: <defaults>
</compile_context>

<pallas_src>
import jax
import jax.numpy as jnp
from jax.experimental import pallas as pl
from jax.experimental.pallas import tpu as pltpu


_MiB = 1024 * 1024
_RESIDENT_W_BYTES = 8 * _MiB        # whole-W-resident path if bf16 W fits here
_VMEM_LIMIT = 48 * _MiB             # safe on v7x (64 MiB/TC) and v5e/v6e


def _round_up(x: int, m: int) -> int:
    return ((x + m - 1) // m) * m


def _pick_m_tiling(batch: int, max_tm: int):
    """Pick (tm, padded_batch). Prefer no padding copy and >= 2 M blocks."""
    max_tm = max(8, min(max_tm, 1024))
    if batch <= max_tm:
        # Whole batch fits in one block; split in two when cleanly possible so
        # both TensorCores on v7x get a "parallel" block to work on.
        if batch >= 16 and batch % 16 == 0:
            return batch // 2, batch
        return batch, batch                    # block dim == full dim: legal
    # Several blocks needed: largest 8-aligned tile <= max_tm dividing batch.
    for t in range(max_tm - max_tm % 8, 7, -8):
        if batch % t == 0:
            return t, batch
    # Rare: no 8-aligned divisor -> pad the batch (one extra copy of x).
    t = max_tm - max_tm % 8
    return t, _round_up(batch, t)


def _resident_kernel(temp_ref, x_ref, w_ref, b_ref, o_ref):
    """o = (x @ W + b) / T with the whole bf16 W resident in VMEM.

    temp_ref: SMEM (1,)     temperature
    x_ref:    VMEM (tm, D)  f32 input tile (cast to bf16 here)
    w_ref:    VMEM (D, N)   bf16 weights (constant index_map -> DMA'd once)
    b_ref:    VMEM (1, N)   f32 bias
    o_ref:    VMEM (tm, N)  f32 scaled logits
    """
    inv_t = 1.0 / temp_ref[0]
    logits = jnp.dot(x_ref[...].astype(jnp.bfloat16), w_ref[...],
                     preferred_element_type=jnp.float32) + b_ref[...]
    o_ref[...] = (logits * inv_t).astype(o_ref.dtype)


def _tiled_kernel(temp_ref, x_ref, w_ref, b_ref, o_ref):
    """Fallback for weights too large to keep resident: (M, N, K) grid,
    accumulating directly into the f32 output block (resident across K)."""
    k = pl.program_id(2)
    partial = jnp.dot(x_ref[...].astype(jnp.bfloat16), w_ref[...],
                      preferred_element_type=jnp.float32)

    @pl.when(k == 0)
    def _first():                      # direct write: no tm*tn zero-init store
        o_ref[...] = partial

    @pl.when(k != 0)
    def _accum():
        o_ref[...] += partial

    @pl.when(k == pl.num_programs(2) - 1)
    def _finalize():
        inv_t = 1.0 / temp_ref[0]
        o_ref[...] = (o_ref[...] + b_ref[...]) * inv_t


def init_temperature_scaling(w, b, temperature):
    """One-time preparation of the frozen base-model parameters.

    w: (D, N) classifier weights, b: (N,) bias, temperature: python float > 0.
    All casting / padding of the frozen parameters happens here, never in the
    per-call forward path.
    """
    if temperature <= 0:
        raise ValueError("Temperature must be positive")
    D, N = w.shape
    temp = jnp.asarray([temperature], dtype=jnp.float32)

    if D * N * 2 <= _RESIDENT_W_BYTES:
        return {
            "mode": "resident",
            "w": w.astype(jnp.bfloat16),                    # (D, N), unpadded
            "b": b.astype(jnp.float32).reshape(1, N),       # (1, N), unpadded
            "temp": temp, "D": D, "N": N,
        }

    # Fallback: pad minimally (D to a 128 multiple; N only if N > 128) — once.
    Dp = _round_up(D, 128)
    tk = next(t for t in (512, 256, 128) if Dp % t == 0)
    if N <= 128:
        tn, Np = N, N
    else:
        tn = 256 if _round_up(N, 128) % 256 == 0 else 128
        Np = _round_up(N, tn)
    w_p = jnp.zeros((Dp, Np), jnp.bfloat16).at[:D, :N].set(w.astype(jnp.bfloat16))
    b_p = jnp.zeros((1, Np), jnp.float32).at[0, :N].set(b.astype(jnp.float32))
    return {
        "mode": "tiled", "w": w_p, "b": b_p, "temp": temp,
        "D": D, "N": N, "Dp": Dp, "Np": Np, "tk": tk, "tn": tn,
    }


def temperature_scaling_forward(x, params):
    """x: (B, ...) input; returns (B, N) temperature-scaled logits (f32)."""
    B = x.shape[0]
    D, N = params["D"], params["N"]
    x2d = x.reshape(B, D)                       # reshape is metadata-only
    if x2d.dtype != jnp.float32:
        x2d = x2d.astype(jnp.float32)
    w_p, b_p, temp = params["w"], params["b"], params["temp"]

    if params["mode"] == "resident":
        # Keep double-buffered f32 x tiles <= ~16 MiB.
        max_tm = max(8, ((16 * _MiB) // (8 * D)) // 8 * 8)
        tm, Bp = _pick_m_tiling(B, max_tm)
        if Bp != B:
            x2d = jnp.pad(x2d, ((0, Bp - B), (0, 0)))
        grid = (Bp // tm,)

        cost = pl.CostEstimate(
            flops=2 * Bp * D * N,
            transcendentals=0,
            bytes_accessed=Bp * D * 4 + D * N * 2 + N * 4 + Bp * N * 4,
        )
        out = pl.pallas_call(
            _resident_kernel,
            out_shape=jax.ShapeDtypeStruct((Bp, N), jnp.float32),
            grid_spec=pltpu.PrefetchScalarGridSpec(
                num_scalar_prefetch=0,
                grid=grid,
                in_specs=[
                    pl.BlockSpec(memory_space=pltpu.MemorySpace.SMEM),   # temp
                    pl.BlockSpec((tm, D), lambda i: (i, 0)),             # x
                    pl.BlockSpec((D, N), lambda i: (0, 0)),              # W resident
                    pl.BlockSpec((1, N), lambda i: (0, 0)),              # b resident
                ],
                out_specs=pl.BlockSpec((tm, N), lambda i: (i, 0)),
            ),
            compiler_params=pltpu.CompilerParams(
                dimension_semantics=("parallel",),
                vmem_limit_bytes=_VMEM_LIMIT,
            ),
            cost_estimate=cost,
        )(temp, x2d, w_p, b_p)
        return out[:B] if Bp != B else out

    # ---- tiled fallback (very large weights) --------------------------------
    Dp, Np, tk, tn = params["Dp"], params["Np"], params["tk"], params["tn"]
    tm, Bp = _pick_m_tiling(B, 512)
    if Bp != B or Dp != D:
        x2d = jnp.pad(x2d, ((0, Bp - B), (0, Dp - D)))
    grid = (Bp // tm, Np // tn, Dp // tk)

    cost = pl.CostEstimate(
        flops=2 * Bp * Dp * Np,
        transcendentals=0,
        bytes_accessed=(Bp * Dp * 4 * (Np // tn)      # x re-read per N block
                        + Dp * Np * 2 * (Bp // tm)    # W re-read per M block
                        + Np * 4 + Bp * Np * 4),
    )
    out = pl.pallas_call(
        _tiled_kernel,
        out_shape=jax.ShapeDtypeStruct((Bp, Np), jnp.float32),
        grid_spec=pltpu.PrefetchScalarGridSpec(
            num_scalar_prefetch=0,
            grid=grid,
            in_specs=[
                pl.BlockSpec(memory_space=pltpu.MemorySpace.SMEM),       # temp
                pl.BlockSpec((tm, tk), lambda i, j, k: (i, k)),          # x
                pl.BlockSpec((tk, tn), lambda i, j, k: (k, j)),          # W
                pl.BlockSpec((1, tn), lambda i, j, k: (0, j)),           # b
            ],
            out_specs=pl.BlockSpec((tm, tn), lambda i, j, k: (i, j)),
        ),
        compiler_params=pltpu.CompilerParams(
            dimension_semantics=("parallel", "parallel", "arbitrary"),
            vmem_limit_bytes=_VMEM_LIMIT,
        ),
        cost_estimate=cost,
    )(temp, x2d, w_p, b_p)
    return out[:B, :N]


if __name__ == "__main__":
    # Small deterministic shapes: batch=2, channels=4, spatial=16x16, 10 classes.
    B, C, H, W_sp = 2, 4, 16, 16
    D = C * H * W_sp                 # 1024
    NUM_CLASSES = 10
    TEMPERATURE = 1.5

    key = jax.random.PRNGKey(0)
    kx, kw, kb = jax.random.split(key, 3)
    x = jax.random.normal(kx, (B, C, H, W_sp), dtype=jnp.float32)
    w = jax.random.normal(kw, (D, NUM_CLASSES), dtype=jnp.float32) * 0.02
    b = jax.random.normal(kb, (NUM_CLASSES,), dtype=jnp.float32) * 0.01

    # One-time prep of the frozen base model (mirrors freeze_base_model()).
    params = init_temperature_scaling(w, b, TEMPERATURE)

    out = temperature_scaling_forward(x, params)
    out = jax.block_until_ready(out)

    # Reference with matching bf16 weight/activation rounding (f32 accumulate),
    # same semantics as the PyTorch module: base_model(x) / temperature.
    x_ref = x.reshape(B, D).astype(jnp.bfloat16).astype(jnp.float32)
    w_ref = w.astype(jnp.bfloat16).astype(jnp.float32)
    ref = (x_ref @ w_ref + b) / TEMPERATURE

    assert out.shape == (B, NUM_CLASSES)
    err = float(jnp.max(jnp.abs(out - ref)))
    assert jnp.allclose(out, ref, atol=2e-3, rtol=2e-3), err

    print("KERNEL_OK")
</pallas_src>

<mosaic_0001>
module attributes {stable_mosaic.version = 11 : i64} {
  func.func @_resident_kernel(%arg0: i32, %arg1: memref<1xf32, #tpu.memory_space<smem>>, %arg2: memref<2x1024xf32, #tpu.memory_space<vmem>>, %arg3: memref<1024x10xbf16, #tpu.memory_space<vmem>>, %arg4: memref<1x10xf32, #tpu.memory_space<vmem>>, %arg5: memref<2x10xf32, #tpu.memory_space<vmem>>) attributes {dimension_semantics = [#tpu.dimension_semantics<parallel>], iteration_bounds = array<i64: 1>, scalar_prefetch = 0 : i64, scratch_operands = 0 : i64, tpu.core_type = #tpu.core_type<tc>, window_params = [{transform_indices = @transform_0, window_bounds = array<i64: 1>}, {transform_indices = @transform_1, window_bounds = array<i64: 2, 1024>}, {pipeline_mode = #tpu.pipeline_mode<synchronous>, transform_indices = @transform_2, window_bounds = array<i64: 1024, 10>}, {pipeline_mode = #tpu.pipeline_mode<synchronous>, transform_indices = @transform_3, window_bounds = array<i64: 1, 10>}, {transform_indices = @transform_4, window_bounds = array<i64: 2, 10>}]} {
    %c0 = arith.constant 0 : index
    %0 = memref.load %arg1[%c0] : memref<1xf32, #tpu.memory_space<smem>>
    %cst = arith.constant 1.000000e+00 : f32
    %1 = arith.divf %cst, %0 : f32
    %c0_0 = arith.constant 0 : index
    %c0_1 = arith.constant 0 : index
    %2 = vector.load %arg2[%c0_0, %c0_1] : memref<2x1024xf32, #tpu.memory_space<vmem>>, vector<2x1024xf32>
    %3 = arith.truncf %2 : vector<2x1024xf32> to vector<2x1024xbf16>
    %c0_2 = arith.constant 0 : index
    %c0_3 = arith.constant 0 : index
    %4 = vector.load %arg3[%c0_2, %c0_3] : memref<1024x10xbf16, #tpu.memory_space<vmem>>, vector<1024x10xbf16>
    %cst_4 = arith.constant dense<0.000000e+00> : vector<2x10xf32>
    %5 = tpu.matmul %3, %4, %cst_4 {dimension_numbers = #tpu.dot_dimension_numbers<[1], [0], [0], [1], [0, 0, 1, 1], [], []>} : vector<2x1024xbf16>, vector<1024x10xbf16>, vector<2x10xf32> -> vector<2x10xf32>
    %c0_5 = arith.constant 0 : index
    %c0_6 = arith.constant 0 : index
    %6 = vector.load %arg4[%c0_5, %c0_6] : memref<1x10xf32, #tpu.memory_space<vmem>>, vector<1x10xf32>
    %7 = vector.broadcast %6 : vector<1x10xf32> to vector<2x10xf32>
    %8 = arith.addf %5, %7 : vector<2x10xf32>
    %9 = vector.broadcast %1 : f32 to vector<2x10xf32>
    %10 = arith.mulf %8, %9 : vector<2x10xf32>
    %c0_7 = arith.constant 0 : index
    %c0_8 = arith.constant 0 : index
    %11 = vector.load %arg5[%c0_7, %c0_8] : memref<2x10xf32, #tpu.memory_space<vmem>>, vector<2x10xf32>
    tpu.vector_store %arg5[%c0_7, %c0_8], %10 {strides = array<i32>} : memref<2x10xf32, #tpu.memory_space<vmem>>, vector<2x10xf32>,
    return
  }
  func.func @transform_0(%arg0: i32) -> i32 {
    %c0_i32 = arith.constant 0 : i32
    %c0_i32_0 = arith.constant 0 : i32
    return %c0_i32 : i32
  }
  func.func @transform_1(%arg0: i32) -> (i32, i32) {
    %c0_i32 = arith.constant 0 : i32
    %c0_i32_0 = arith.constant 0 : i32
    return %arg0, %c0_i32 : i32, i32
  }
  func.func @transform_2(%arg0: i32) -> (i32, i32) {
    %c0_i32 = arith.constant 0 : i32
    %c0_i32_0 = arith.constant 0 : i32
    %c0_i32_1 = arith.constant 0 : i32
    return %c0_i32, %c0_i32_0 : i32, i32
  }
  func.func @transform_3(%arg0: i32) -> (i32, i32) {
    %c0_i32 = arith.constant 0 : i32
    %c0_i32_0 = arith.constant 0 : i32
    %c0_i32_1 = arith.constant 0 : i32
    return %c0_i32, %c0_i32_0 : i32, i32
  }
  func.func @transform_4(%arg0: i32) -> (i32, i32) {
    %c0_i32 = arith.constant 0 : i32
    %c0_i32_0 = arith.constant 0 : i32
    return %arg0, %c0_i32 : i32, i32
  }
}

</mosaic_0001>

<llo_original>
// kernel: tpu_custom_call.1
$region0: #{tpu_custom_call.1}
  #allocation0 [shape = 'u32[]', space=smem, size = 0x4, offset = 0x4, fixed_abs, tag = 'smem constant byte address 0x4 - core index']
  #allocation1 [shape = 'u32[144,128]{1,0:T(1,128)}', space=vmem, size = 0x12000, scoped, tag = 'internal scratch']
  #allocation2 [shape = 'f32[1]{0:T(128)S(6)}', space=smem, size = 0x200, scoped, tag = 'scoped memory for tpu_custom_call.1']
  %s0 = inlined_call_operand.<no memory space> [shape: f32[1], index: 0, kind: input, shape index: {}]
  %s1 = inlined_call_operand.vmem [shape: f32[2,1024], index: 1, kind: input, shape index: {}]
  %s2 = inlined_call_operand.vmem [shape: bf16[1024,10], index: 2, kind: input, shape index: {}]
  %s3 = inlined_call_operand.vmem [shape: f32[1,10], index: 3, kind: input, shape index: {}]
  %s4 = inlined_call_operand.hbm [shape: f32[2,10], index: 4, kind: output, shape index: {}]
  %s5 = sld [smem:[#allocation0]]
  $region26: #{tpu_custom_call.1} parent=0
    _
  %s7 = ssub.s32 1, %s5
  %s8 = scalar_select 0, %s7, %s5
  %9 = sst [smem:[#allocation2]] %s0
  $region1: #{tpu_custom_call.1} parent=0
    #allocation3 [shape = 'u8[1024]{0}', space=vmem, size = 0x400, scoped, tag = 'output window, operand 0, single buffered']
    #allocation4 [shape = 's32[1]{0}', space=sflag, size = 0x4, scoped, tag = 'scoped memory for tpu_custom_call.1']
    %10 = vsyncpa [#allocation4], 0
    // Predicated region
    $region2: #{tpu_custom_call.1} parent=1 // pred_check
      _
    $region3: #{tpu_custom_call.1} parent=1 // pred_check_branch
      %12 = sbr.rel (0) target = $region5
    $region4: #{tpu_custom_call.1} parent=1 // pred_region
      _
    $region5: #{tpu_custom_call.1} parent=1 // pred_fallthru
      _
    // Predicated region
    $region6: #{tpu_custom_call.1} parent=1 // pred_check
      _
    $region7: #{tpu_custom_call.1} parent=1 // pred_check_branch
      %14 = sbr.rel (0) target = $region9
    $region8: #{tpu_custom_call.1} parent=1 // pred_region
      _
    $region9: #{tpu_custom_call.1} parent=1 // pred_fallthru
      _
    // Predicated region
    $region10: #{tpu_custom_call.1} parent=1 // pred_check
      _
    $region11: #{tpu_custom_call.1} parent=1 // pred_check_branch
      %16 = sbr.rel (0) target = $region13
    $region12: #{tpu_custom_call.1} parent=1 // pred_region
      _
    $region13: #{tpu_custom_call.1} parent=1 // pred_fallthru
      _
    // Predicated region
    $region14: #{tpu_custom_call.1} parent=1 // pred_check
      _
    $region15: #{tpu_custom_call.1} parent=1 // pred_check_branch
      %18 = sbr.rel (0) target = $region17
    $region16: #{tpu_custom_call.1} parent=1 // pred_region
      _
    $region17: #{tpu_custom_call.1} parent=1 // pred_fallthru
      _
    %s20 = sld [smem:[#allocation2]]
    %v21 = vstv %s20
    %v22 = vrcp.pop %v21
    %s23 = vtos %v22
    %v24 = vld [vmem:[%s1] sm:$0xff]
    %v25 = vld [vmem:[%s1 + $0x8] sm:$0xff]
    %v28 = vcombine.high %v24, %v24
    %v30 = vunpack.c.l.s4 1983009808
    %v31 = vunpack.c.0.s8 %v30
    %v32 = vlaneseq
    %v33 = vshrl.u32 %v32, 7
    %v34 = vsub.s32 %v31, %v33
    %v35 = vrot.slane %v24, %v34
    %v37 = vunpack.c.l.s4 1983009808
    %v38 = vunpack.c.0.s8 %v37
    %v39 = vlaneseq
    %v40 = vshrl.u32 %v39, 7
    %v41 = vsub.s32 %v38, %v40
    %v42 = vrot.slane %v28, %v41
    %v43 = vcombine.high %v35, %v35
    %v44 = vcombine.high %v42, %v42
    %v45 = vcombine.high %v25, %v25
    %v47 = vunpack.c.l.s4 1983009808
    %v48 = vunpack.c.0.s8 %v47
    %v49 = vlaneseq
    %v50 = vshrl.u32 %v49, 7
    %v51 = vsub.s32 %v48, %v50
    %v52 = vrot.slane %v25, %v51
    %v54 = vunpack.c.l.s4 1983009808
    %v55 = vunpack.c.0.s8 %v54
    %v56 = vlaneseq
    %v57 = vshrl.u32 %v56, 7
    %v58 = vsub.s32 %v55, %v57
    %v59 = vrot.slane %v45, %v58
    %v60 = vcombine.high %v52, %v52
    %v61 = vcombine.high %v59, %v59
    %v70 = vpack.c.bf16 %v35, %v35
    %v71 = vpack.c.bf16 %v43, %v43
    %v72 = vpack.c.bf16 %v42, %v42
    %v73 = vpack.c.bf16 %v44, %v44
    %v74 = vpack.c.bf16 %v52, %v52
    %v75 = vpack.c.bf16 %v60, %v60
    %v76 = vpack.c.bf16 %v59, %v59
    %v77 = vpack.c.bf16 %v61, %v61
    %v78 = vld [vmem:[%s2] sm:$0xf]
    %v79 = vld [vmem:[%s2 + $0x4] sm:$0xf]
    %v80 = vld [vmem:[%s2 + $0x8] sm:$0xf]
    %v81 = vld [vmem:[%s2 + $0xc] sm:$0xf]
    %v82 = vld [vmem:[%s2 + $0x10] sm:$0xf]
    %v83 = vld [vmem:[%s2 + $0x14] sm:$0xf]
    %v84 = vld [vmem:[%s2 + $0x18] sm:$0xf]
    %v85 = vld [vmem:[%s2 + $0x1c] sm:$0xf]
    %v86 = vld [vmem:[%s2 + $0x20] sm:$0xf]
    %v87 = vld [vmem:[%s2 + $0x24] sm:$0xf]
    %v88 = vld [vmem:[%s2 + $0x28] sm:$0xf]
    %v89 = vld [vmem:[%s2 + $0x2c] sm:$0xf]
    %v90 = vld [vmem:[%s2 + $0x30] sm:$0xf]
    %v91 = vld [vmem:[%s2 + $0x34] sm:$0xf]
    %v92 = vld [vmem:[%s2 + $0x38] sm:$0xf]
    %v93 = vld [vmem:[%s2 + $0x3c] sm:$0xf]
    %v94 = vld [vmem:[%s2 + $0x40] sm:$0xf]
    %v95 = vld [vmem:[%s2 + $0x44] sm:$0xf]
    %v96 = vld [vmem:[%s2 + $0x48] sm:$0xf]
    %v97 = vld [vmem:[%s2 + $0x4c] sm:$0xf]
    %v98 = vld [vmem:[%s2 + $0x50] sm:$0xf]
    %v99 = vld [vmem:[%s2 + $0x54] sm:$0xf]
    %v100 = vld [vmem:[%s2 + $0x58] sm:$0xf]
    %v101 = vld [vmem:[%s2 + $0x5c] sm:$0xf]
    %v102 = vld [vmem:[%s2 + $0x60] sm:$0xf]
    %v103 = vld [vmem:[%s2 + $0x64] sm:$0xf]
    %v104 = vld [vmem:[%s2 + $0x68] sm:$0xf]
    %v105 = vld [vmem:[%s2 + $0x6c] sm:$0xf]
    %v106 = vld [vmem:[%s2 + $0x70] sm:$0xf]
    %v107 = vld [vmem:[%s2 + $0x74] sm:$0xf]
    %v108 = vld [vmem:[%s2 + $0x78] sm:$0xf]
    %v109 = vld [vmem:[%s2 + $0x7c] sm:$0xf]
    %v110 = vld [vmem:[%s2 + $0x80] sm:$0xf]
    %v111 = vld [vmem:[%s2 + $0x84] sm:$0xf]
    %v112 = vld [vmem:[%s2 + $0x88] sm:$0xf]
    %v113 = vld [vmem:[%s2 + $0x8c] sm:$0xf]
    %v114 = vld [vmem:[%s2 + $0x90] sm:$0xf]
    %v115 = vld [vmem:[%s2 + $0x94] sm:$0xf]
    %v116 = vld [vmem:[%s2 + $0x98] sm:$0xf]
    %v117 = vld [vmem:[%s2 + $0x9c] sm:$0xf]
    %v118 = vld [vmem:[%s2 + $0xa0] sm:$0xf]
    %v119 = vld [vmem:[%s2 + $0xa4] sm:$0xf]
    %v120 = vld [vmem:[%s2 + $0xa8] sm:$0xf]
    %v121 = vld [vmem:[%s2 + $0xac] sm:$0xf]
    %v122 = vld [vmem:[%s2 + $0xb0] sm:$0xf]
    %v123 = vld [vmem:[%s2 + $0xb4] sm:$0xf]
    %v124 = vld [vmem:[%s2 + $0xb8] sm:$0xf]
    %v125 = vld [vmem:[%s2 + $0xbc] sm:$0xf]
    %v126 = vld [vmem:[%s2 + $0xc0] sm:$0xf]
    %v127 = vld [vmem:[%s2 + $0xc4] sm:$0xf]
    %v128 = vld [vmem:[%s2 + $0xc8] sm:$0xf]
    %v129 = vld [vmem:[%s2 + $0xcc] sm:$0xf]
    %v130 = vld [vmem:[%s2 + $0xd0] sm:$0xf]
    %v131 = vld [vmem:[%s2 + $0xd4] sm:$0xf]
    %v132 = vld [vmem:[%s2 + $0xd8] sm:$0xf]
    %v133 = vld [vmem:[%s2 + $0xdc] sm:$0xf]
    %v134 = vld [vmem:[%s2 + $0xe0] sm:$0xf]
    %v135 = vld [vmem:[%s2 + $0xe4] sm:$0xf]
    %v136 = vld [vmem:[%s2 + $0xe8] sm:$0xf]
    %v137 = vld [vmem:[%s2 + $0xec] sm:$0xf]
    %v138 = vld [vmem:[%s2 + $0xf0] sm:$0xf]
    %v139 = vld [vmem:[%s2 + $0xf4] sm:$0xf]
    %v140 = vld [vmem:[%s2 + $0xf8] sm:$0xf]
    %v141 = vld [vmem:[%s2 + $0xfc] sm:$0xf]
    %v142 = vld [vmem:[%s2 + $0x100] sm:$0xf]
    %v143 = vld [vmem:[%s2 + $0x104] sm:$0xf]
    %v144 = vld [vmem:[%s2 + $0x108] sm:$0xf]
    %v145 = vld [vmem:[%s2 + $0x10c] sm:$0xf]
    %v146 = vld [vmem:[%s2 + $0x110] sm:$0xf]
    %v147 = vld [vmem:[%s2 + $0x114] sm:$0xf]
    %v148 = vld [vmem:[%s2 + $0x118] sm:$0xf]
    %v149 = vld [vmem:[%s2 + $0x11c] sm:$0xf]
    %v150 = vld [vmem:[%s2 + $0x120] sm:$0xf]
    %v151 = vld [vmem:[%s2 + $0x124] sm:$0xf]
    %v152 = vld [vmem:[%s2 + $0x128] sm:$0xf]
    %v153 = vld [vmem:[%s2 + $0x12c] sm:$0xf]
    %v154 = vld [vmem:[%s2 + $0x130] sm:$0xf]
    %v155 = vld [vmem:[%s2 + $0x134] sm:$0xf]
    %v156 = vld [vmem:[%s2 + $0x138] sm:$0xf]
    %v157 = vld [vmem:[%s2 + $0x13c] sm:$0xf]
    %v158 = vld [vmem:[%s2 + $0x140] sm:$0xf]
    %v159 = vld [vmem:[%s2 + $0x144] sm:$0xf]
    %v160 = vld [vmem:[%s2 + $0x148] sm:$0xf]
    %v161 = vld [vmem:[%s2 + $0x14c] sm:$0xf]
    %v162 = vld [vmem:[%s2 + $0x150] sm:$0xf]
    %v163 = vld [vmem:[%s2 + $0x154] sm:$0xf]
    %v164 = vld [vmem:[%s2 + $0x158] sm:$0xf]
    %v165 = vld [vmem:[%s2 + $0x15c] sm:$0xf]
    %v166 = vld [vmem:[%s2 + $0x160] sm:$0xf]
    %v167 = vld [vmem:[%s2 + $0x164] sm:$0xf]
    %v168 = vld [vmem:[%s2 + $0x168] sm:$0xf]
    %v169 = vld [vmem:[%s2 + $0x16c] sm:$0xf]
    %v170 = vld [vmem:[%s2 + $0x170] sm:$0xf]
    %v171 = vld [vmem:[%s2 + $0x174] sm:$0xf]
    %v172 = vld [vmem:[%s2 + $0x178] sm:$0xf]
    %v173 = vld [vmem:[%s2 + $0x17c] sm:$0xf]
    %v174 = vld [vmem:[%s2 + $0x180] sm:$0xf]
    %v175 = vld [vmem:[%s2 + $0x184] sm:$0xf]
    %v176 = vld [vmem:[%s2 + $0x188] sm:$0xf]
    %v177 = vld [vmem:[%s2 + $0x18c] sm:$0xf]
    %v178 = vld [vmem:[%s2 + $0x190] sm:$0xf]
    %v179 = vld [vmem:[%s2 + $0x194] sm:$0xf]
    %v180 = vld [vmem:[%s2 + $0x198] sm:$0xf]
    %v181 = vld [vmem:[%s2 + $0x19c] sm:$0xf]
    %v182 = vld [vmem:[%s2 + $0x1a0] sm:$0xf]
    %v183 = vld [vmem:[%s2 + $0x1a4] sm:$0xf]
    %v184 = vld [vmem:[%s2 + $0x1a8] sm:$0xf]
    %v185 = vld [vmem:[%s2 + $0x1ac] sm:$0xf]
    %v186 = vld [vmem:[%s2 + $0x1b0] sm:$0xf]
    %v187 = vld [vmem:[%s2 + $0x1b4] sm:$0xf]
    %v188 = vld [vmem:[%s2 + $0x1b8] sm:$0xf]
    %v189 = vld [vmem:[%s2 + $0x1bc] sm:$0xf]
    %v190 = vld [vmem:[%s2 + $0x1c0] sm:$0xf]
    %v191 = vld [vmem:[%s2 + $0x1c4] sm:$0xf]
    %v192 = vld [vmem:[%s2 + $0x1c8] sm:$0xf]
    %v193 = vld [vmem:[%s2 + $0x1cc] sm:$0xf]
    %v194 = vld [vmem:[%s2 + $0x1d0] sm:$0xf]
    %v195 = vld [vmem:[%s2 + $0x1d4] sm:$0xf]
    %v196 = vld [vmem:[%s2 + $0x1d8] sm:$0xf]
    %v197 = vld [vmem:[%s2 + $0x1dc] sm:$0xf]
    %v198 = vld [vmem:[%s2 + $0x1e0] sm:$0xf]
    %v199 = vld [vmem:[%s2 + $0x1e4] sm:$0xf]
    %v200 = vld [vmem:[%s2 + $0x1e8] sm:$0xf]
    %v201 = vld [vmem:[%s2 + $0x1ec] sm:$0xf]
    %v202 = vld [vmem:[%s2 + $0x1f0] sm:$0xf]
    %v203 = vld [vmem:[%s2 + $0x1f4] sm:$0xf]
    %v204 = vld [vmem:[%s2 + $0x1f8] sm:$0xf]
    %v205 = vld [vmem:[%s2 + $0x1fc] sm:$0xf]
    %v206 = vld [vmem:[%s3] sm:$0x1]
    %v208 = vlaneseq
    %v209 = vshrl.u32 %v208, 7
    %v210 = vsub.s32 0, %v209
    %v211 = vrot.slane %v206, %v210
    %v341 = vunpack.c.l.b16 %v78
    %v342 = vunpack.c.l.b16 %v79
    %v343 = vunpack.c.l.b16 %v80
    %v344 = vunpack.c.l.b16 %v81
    %v345 = vunpack.c.l.b16 %v82
    %v346 = vunpack.c.l.b16 %v83
    %v347 = vunpack.c.l.b16 %v84
    %v348 = vunpack.c.l.b16 %v85
    %v349 = vunpack.c.l.b16 %v86
    %v350 = vunpack.c.l.b16 %v87
    %v351 = vunpack.c.l.b16 %v88
    %v352 = vunpack.c.l.b16 %v89
    %v353 = vunpack.c.l.b16 %v90
    %v354 = vunpack.c.l.b16 %v91
    %v355 = vunpack.c.l.b16 %v92
    %v356 = vunpack.c.l.b16 %v93
    %v357 = vunpack.c.l.b16 %v94
    %v358 = vunpack.c.l.b16 %v95
    %v359 = vunpack.c.l.b16 %v96
    %v360 = vunpack.c.l.b16 %v97
    %v361 = vunpack.c.l.b16 %v98
    %v362 = vunpack.c.l.b16 %v99
    %v363 = vunpack.c.l.b16 %v100
    %v364 = vunpack.c.l.b16 %v101
    %v365 = vunpack.c.l.b16 %v102
    %v366 = vunpack.c.l.b16 %v103
    %v367 = vunpack.c.l.b16 %v104
    %v368 = vunpack.c.l.b16 %v105
    %v369 = vunpack.c.l.b16 %v106
    %v370 = vunpack.c.l.b16 %v107
    %v371 = vunpack.c.l.b16 %v108
    %v372 = vunpack.c.l.b16 %v109
    %v373 = vunpack.c.l.b16 %v110
    %v374 = vunpack.c.l.b16 %v111
    %v375 = vunpack.c.l.b16 %v112
    %v376 = vunpack.c.l.b16 %v113
    %v377 = vunpack.c.l.b16 %v114
    %v378 = vunpack.c.l.b16 %v115
    %v379 = vunpack.c.l.b16 %v116
    %v380 = vunpack.c.l.b16 %v117
    %v381 = vunpack.c.l.b16 %v118
    %v382 = vunpack.c.l.b16 %v119
    %v383 = vunpack.c.l.b16 %v120
    %v384 = vunpack.c.l.b16 %v121
    %v385 = vunpack.c.l.b16 %v122
    %v386 = vunpack.c.l.b16 %v123
    %v387 = vunpack.c.l.b16 %v124
    %v388 = vunpack.c.l.b16 %v125
    %v389 = vunpack.c.l.b16 %v126
    %v390 = vunpack.c.l.b16 %v127
    %v391 = vunpack.c.l.b16 %v128
    %v392 = vunpack.c.l.b16 %v129
    %v393 = vunpack.c.l.b16 %v130
    %v394 = vunpack.c.l.b16 %v131
    %v395 = vunpack.c.l.b16 %v132
    %v396 = vunpack.c.l.b16 %v133
    %v397 = vunpack.c.l.b16 %v134
    %v398 = vunpack.c.l.b16 %v135
    %v399 = vunpack.c.l.b16 %v136
    %v400 = vunpack.c.l.b16 %v137
    %v401 = vunpack.c.l.b16 %v138
    %v402 = vunpack.c.l.b16 %v139
    %v403 = vunpack.c.l.b16 %v140
    %v404 = vunpack.c.l.b16 %v141
    %v405 = vunpack.c.l.b16 %v142
    %v406 = vunpack.c.l.b16 %v143
    %v407 = vunpack.c.l.b16 %v144
    %v408 = vunpack.c.l.b16 %v145
    %v409 = vunpack.c.l.b16 %v146
    %v410 = vunpack.c.l.b16 %v147
    %v411 = vunpack.c.l.b16 %v148
    %v412 = vunpack.c.l.b16 %v149
    %v413 = vunpack.c.l.b16 %v150
    %v414 = vunpack.c.l.b16 %v151
    %v415 = vunpack.c.l.b16 %v152
    %v416 = vunpack.c.l.b16 %v153
    %v417 = vunpack.c.l.b16 %v154
    %v418 = vunpack.c.l.b16 %v155
    %v419 = vunpack.c.l.b16 %v156
    %v420 = vunpack.c.l.b16 %v157
    %v421 = vunpack.c.l.b16 %v158
    %v422 = vunpack.c.l.b16 %v159
    %v423 = vunpack.c.l.b16 %v160
    %v424 = vunpack.c.l.b16 %v161
    %v425 = vunpack.c.l.b16 %v162
    %v426 = vunpack.c.l.b16 %v163
    %v427 = vunpack.c.l.b16 %v164
    %v428 = vunpack.c.l.b16 %v165
    %v429 = vunpack.c.l.b16 %v166
    %v430 = vunpack.c.l.b16 %v167
    %v431 = vunpack.c.l.b16 %v168
    %v432 = vunpack.c.l.b16 %v169
    %v433 = vunpack.c.l.b16 %v170
    %v434 = vunpack.c.l.b16 %v171
    %v435 = vunpack.c.l.b16 %v172
    %v436 = vunpack.c.l.b16 %v173
    %v437 = vunpack.c.l.b16 %v174
    %v438 = vunpack.c.l.b16 %v175
    %v439 = vunpack.c.l.b16 %v176
    %v440 = vunpack.c.l.b16 %v177
    %v441 = vunpack.c.l.b16 %v178
    %v442 = vunpack.c.l.b16 %v179
    %v443 = vunpack.c.l.b16 %v180
    %v444 = vunpack.c.l.b16 %v181
    %v445 = vunpack.c.l.b16 %v182
    %v446 = vunpack.c.l.b16 %v183
    %v447 = vunpack.c.l.b16 %v184
    %v448 = vunpack.c.l.b16 %v185
    %v449 = vunpack.c.l.b16 %v186
    %v450 = vunpack.c.l.b16 %v187
    %v451 = vunpack.c.l.b16 %v188
    %v452 = vunpack.c.l.b16 %v189
    %v453 = vunpack.c.l.b16 %v190
    %v454 = vunpack.c.l.b16 %v191
    %v455 = vunpack.c.l.b16 %v192
    %v456 = vunpack.c.l.b16 %v193
    %v457 = vunpack.c.l.b16 %v194
    %v458 = vunpack.c.l.b16 %v195
    %v459 = vunpack.c.l.b16 %v196
    %v460 = vunpack.c.l.b16 %v197
    %v461 = vunpack.c.l.b16 %v198
    %v462 = vunpack.c.l.b16 %v199
    %v463 = vunpack.c.l.b16 %v200
    %v464 = vunpack.c.l.b16 %v201
    %v465 = vunpack.c.l.b16 %v202
    %v466 = vunpack.c.l.b16 %v203
    %v467 = vunpack.c.l.b16 %v204
    %v468 = vunpack.c.l.b16 %v205
    %v469 = vpack.c.b16 %v342, %v341
    %v470 = vpack.c.b16 %v344, %v343
    %v471 = vpack.c.b16 %v346, %v345
    %v472 = vpack.c.b16 %v348, %v347
    %v473 = vpack.c.b16 %v350, %v349
    %v474 = vpack.c.b16 %v352, %v351
    %v475 = vpack.c.b16 %v354, %v353
    %v476 = vpack.c.b16 %v356, %v355
    %v477 = vpack.c.b16 %v358, %v357
    %v478 = vpack.c.b16 %v360, %v359
    %v479 = vpack.c.b16 %v362, %v361
    %v480 = vpack.c.b16 %v364, %v363
    %v481 = vpack.c.b16 %v366, %v365
    %v482 = vpack.c.b16 %v368, %v367
    %v483 = vpack.c.b16 %v370, %v369
    %v484 = vpack.c.b16 %v372, %v371
    %v485 = vpack.c.b16 %v374, %v373
    %v486 = vpack.c.b16 %v376, %v375
    %v487 = vpack.c.b16 %v378, %v377
    %v488 = vpack.c.b16 %v380, %v379
    %v489 = vpack.c.b16 %v382, %v381
    %v490 = vpack.c.b16 %v384, %v383
    %v491 = vpack.c.b16 %v386, %v385
    %v492 = vpack.c.b16 %v388, %v387
    %v493 = vpack.c.b16 %v390, %v389
    %v494 = vpack.c.b16 %v392, %v391
    %v495 = vpack.c.b16 %v394, %v393
    %v496 = vpack.c.b16 %v396, %v395
    %v497 = vpack.c.b16 %v398, %v397
    %v498 = vpack.c.b16 %v400, %v399
    %v499 = vpack.c.b16 %v402, %v401
    %v500 = vpack.c.b16 %v404, %v403
    %v501 = vpack.c.b16 %v406, %v405
    %v502 = vpack.c.b16 %v408, %v407
    %v503 = vpack.c.b16 %v410, %v409
    %v504 = vpack.c.b16 %v412, %v411
    %v505 = vpack.c.b16 %v414, %v413
    %v506 = vpack.c.b16 %v416, %v415
    %v507 = vpack.c.b16 %v418, %v417
    %v508 = vpack.c.b16 %v420, %v419
    %v509 = vpack.c.b16 %v422, %v421
    %v510 = vpack.c.b16 %v424, %v423
    %v511 = vpack.c.b16 %v426, %v425
    %v512 = vpack.c.b16 %v428, %v427
    %v513 = vpack.c.b16 %v430, %v429
    %v514 = vpack.c.b16 %v432, %v431
    %v515 = vpack.c.b16 %v434, %v433
    %v516 = vpack.c.b16 %v436, %v435
    %v517 = vpack.c.b16 %v438, %v437
    %v518 = vpack.c.b16 %v440, %v439
    %v519 = vpack.c.b16 %v442, %v441
    %v520 = vpack.c.b16 %v444, %v443
    %v521 = vpack.c.b16 %v446, %v445
    %v522 = vpack.c.b16 %v448, %v447
    %v523 = vpack.c.b16 %v450, %v449
    %v524 = vpack.c.b16 %v452, %v451
    %v525 = vpack.c.b16 %v454, %v453
    %v526 = vpack.c.b16 %v456, %v455
    %v527 = vpack.c.b16 %v458, %v457
    %v528 = vpack.c.b16 %v460, %v459
    %v529 = vpack.c.b16 %v462, %v461
    %v530 = vpack.c.b16 %v464, %v463
    %v531 = vpack.c.b16 %v466, %v465
    %v532 = vpack.c.b16 %v468, %v467
    %597 = vmatprep.subr.bf16.mxu0 0
    %598 = vmatpush1.bf16.msra.mxu0 %v469
    %599 = vmatprep.subr.bf16.mxu0 0
    %600 = vmatpush1.bf16.msra.mxu0 %v470
    %601 = vmatprep.subr.bf16.mxu0 0
    %602 = vmatpush1.bf16.msra.mxu0 %v471
    %603 = vmatprep.subr.bf16.mxu0 0
    %604 = vmatpush1.bf16.msra.mxu0 %v472
    %605 = vmatprep.subr.bf16.mxu0 0
    %606 = vmatpush1.bf16.msra.mxu0 %v473
    %607 = vmatprep.subr.bf16.mxu0 0
    %608 = vmatpush1.bf16.msra.mxu0 %v474
    %609 = vmatprep.subr.bf16.mxu0 0
    %610 = vmatpush1.bf16.msra.mxu0 %v475
    %611 = vmatprep.subr.bf16.mxu0 0
    %612 = vmatpush1.bf16.msra.mxu0 %v476
    %613 = vmatprep.subr.bf16.mxu0 0
    %614 = vmatpush1.bf16.msra.mxu0 %v477
    %615 = vmatprep.subr.bf16.mxu0 0
    %616 = vmatpush1.bf16.msra.mxu0 %v478
    %617 = vmatprep.subr.bf16.mxu0 0
    %618 = vmatpush1.bf16.msra.mxu0 %v479
    %619 = vmatprep.subr.bf16.mxu0 0
    %620 = vmatpush1.bf16.msra.mxu0 %v480
    %621 = vmatprep.subr.bf16.mxu0 0
    %622 = vmatpush1.bf16.msra.mxu0 %v481
    %623 = vmatprep.subr.bf16.mxu0 0
    %624 = vmatpush1.bf16.msra.mxu0 %v482
    %625 = vmatprep.subr.bf16.mxu0 0
    %626 = vmatpush1.bf16.msra.mxu0 %v483
    %627 = vmatprep.subr.bf16.mxu0 0
    %628 = vmatpush1.bf16.msra.mxu0 %v484
    %629 = vmatprep.mubr.bf16.mxu0 %v71
    %630 = vmatmul.mubr.bf16.gmra.mrb[0].mxu0 %v70
    %v631 = vpop.f32.mrb[0].mxu0
    %v632 = vadd.f32 %v211, %v631
    %v633 = vpop.f32.mrb[0].mxu0
    %v634 = vpop.f32.mrb[0].mxu0
    %v635 = vpop.f32.mrb[0].mxu0
    %636 = vdwg.mxu0
    %637 = vmatprep.subr.bf16.mxu0 0
    %638 = vmatpush1.bf16.msra.mxu0 %v485
    %639 = vmatprep.subr.bf16.mxu0 0
    %640 = vmatpush1.bf16.msra.mxu0 %v486
    %641 = vmatprep.subr.bf16.mxu0 0
    %642 = vmatpush1.bf16.msra.mxu0 %v487
    %643 = vmatprep.subr.bf16.mxu0 0
    %644 = vmatpush1.bf16.msra.mxu0 %v488
    %645 = vmatprep.subr.bf16.mxu0 0
    %646 = vmatpush1.bf16.msra.mxu0 %v489
    %647 = vmatprep.subr.bf16.mxu0 0
    %648 = vmatpush1.bf16.msra.mxu0 %v490
    %649 = vmatprep.subr.bf16.mxu0 0
    %650 = vmatpush1.bf16.msra.mxu0 %v491
    %651 = vmatprep.subr.bf16.mxu0 0
    %652 = vmatpush1.bf16.msra.mxu0 %v492
    %653 = vmatprep.subr.bf16.mxu0 0
    %654 = vmatpush1.bf16.msra.mxu0 %v493
    %655 = vmatprep.subr.bf16.mxu0 0
    %656 = vmatpush1.bf16.msra.mxu0 %v494
    %657 = vmatprep.subr.bf16.mxu0 0
    %658 = vmatpush1.bf16.msra.mxu0 %v495
    %659 = vmatprep.subr.bf16.mxu0 0
    %660 = vmatpush1.bf16.msra.mxu0 %v496
    %661 = vmatprep.subr.bf16.mxu0 0
    %662 = vmatpush1.bf16.msra.mxu0 %v497
    %663 = vmatprep.subr.bf16.mxu0 0
    %664 = vmatpush1.bf16.msra.mxu0 %v498
    %665 = vmatprep.subr.bf16.mxu0 0
    %666 = vmatpush1.bf16.msra.mxu0 %v499
    %667 = vmatprep.subr.bf16.mxu0 0
    %668 = vmatpush1.bf16.msra.mxu0 %v500
    %669 = vmatprep.mubr.bf16.mxu0 %v73
    %670 = vmatmul.mubr.bf16.gmra.mrb[0].mxu0 %v72
    %v671 = vpop.f32.mrb[0].mxu0
    %v672 = vadd.f32 %v632, %v671
    %v673 = vpop.f32.mrb[0].mxu0
    %v674 = vpop.f32.mrb[0].mxu0
    %v675 = vpop.f32.mrb[0].mxu0
    %676 = vdwg.mxu0
    %677 = vmatprep.subr.bf16.mxu0 0
    %678 = vmatpush1.bf16.msra.mxu0 %v501
    %679 = vmatprep.subr.bf16.mxu0 0
    %680 = vmatpush1.bf16.msra.mxu0 %v502
    %681 = vmatprep.subr.bf16.mxu0 0
    %682 = vmatpush1.bf16.msra.mxu0 %v503
    %683 = vmatprep.subr.bf16.mxu0 0
    %684 = vmatpush1.bf16.msra.mxu0 %v504
    %685 = vmatprep.subr.bf16.mxu0 0
    %686 = vmatpush1.bf16.msra.mxu0 %v505
    %687 = vmatprep.subr.bf16.mxu0 0
    %688 = vmatpush1.bf16.msra.mxu0 %v506
    %689 = vmatprep.subr.bf16.mxu0 0
    %690 = vmatpush1.bf16.msra.mxu0 %v507
    %691 = vmatprep.subr.bf16.mxu0 0
    %692 = vmatpush1.bf16.msra.mxu0 %v508
    %693 = vmatprep.subr.bf16.mxu0 0
    %694 = vmatpush1.bf16.msra.mxu0 %v509
    %695 = vmatprep.subr.bf16.mxu0 0
    %696 = vmatpush1.bf16.msra.mxu0 %v510
    %697 = vmatprep.subr.bf16.mxu0 0
    %698 = vmatpush1.bf16.msra.mxu0 %v511
    %699 = vmatprep.subr.bf16.mxu0 0
    %700 = vmatpush1.bf16.msra.mxu0 %v512
    %701 = vmatprep.subr.bf16.mxu0 0
    %702 = vmatpush1.bf16.msra.mxu0 %v513
    %703 = vmatprep.subr.bf16.mxu0 0
    %704 = vmatpush1.bf16.msra.mxu0 %v514
    %705 = vmatprep.subr.bf16.mxu0 0
    %706 = vmatpush1.bf16.msra.mxu0 %v515
    %707 = vmatprep.subr.bf16.mxu0 0
    %708 = vmatpush1.bf16.msra.mxu0 %v516
    %709 = vmatprep.mubr.bf16.mxu0 %v75
    %710 = vmatmul.mubr.bf16.gmra.mrb[0].mxu0 %v74
    %v711 = vpop.f32.mrb[0].mxu0
    %v712 = vadd.f32 %v672, %v711
    %v713 = vpop.f32.mrb[0].mxu0
    %v714 = vpop.f32.mrb[0].mxu0
    %v715 = vpop.f32.mrb[0].mxu0
    %716 = vdwg.mxu0
    %717 = vmatprep.subr.bf16.mxu0 0
    %718 = vmatpush1.bf16.msra.mxu0 %v517
    %719 = vmatprep.subr.bf16.mxu0 0
    %720 = vmatpush1.bf16.msra.mxu0 %v518
    %721 = vmatprep.subr.bf16.mxu0 0
    %722 = vmatpush1.bf16.msra.mxu0 %v519
    %723 = vmatprep.subr.bf16.mxu0 0
    %724 = vmatpush1.bf16.msra.mxu0 %v520
    %725 = vmatprep.subr.bf16.mxu0 0
    %726 = vmatpush1.bf16.msra.mxu0 %v521
    %727 = vmatprep.subr.bf16.mxu0 0
    %728 = vmatpush1.bf16.msra.mxu0 %v522
    %729 = vmatprep.subr.bf16.mxu0 0
    %730 = vmatpush1.bf16.msra.mxu0 %v523
    %731 = vmatprep.subr.bf16.mxu0 0
    %732 = vmatpush1.bf16.msra.mxu0 %v524
    %733 = vmatprep.subr.bf16.mxu0 0
    %734 = vmatpush1.bf16.msra.mxu0 %v525
    %735 = vmatprep.subr.bf16.mxu0 0
    %736 = vmatpush1.bf16.msra.mxu0 %v526
    %737 = vmatprep.subr.bf16.mxu0 0
    %738 = vmatpush1.bf16.msra.mxu0 %v527
    %739 = vmatprep.subr.bf16.mxu0 0
    %740 = vmatpush1.bf16.msra.mxu0 %v528
    %741 = vmatprep.subr.bf16.mxu0 0
    %742 = vmatpush1.bf16.msra.mxu0 %v529
    %743 = vmatprep.subr.bf16.mxu0 0
    %744 = vmatpush1.bf16.msra.mxu0 %v530
    %745 = vmatprep.subr.bf16.mxu0 0
    %746 = vmatpush1.bf16.msra.mxu0 %v531
    %747 = vmatprep.subr.bf16.mxu0 0
    %748 = vmatpush1.bf16.msra.mxu0 %v532
    %749 = vmatprep.mubr.bf16.mxu0 %v77
    %750 = vmatmul.mubr.bf16.gmra.mrb[0].mxu0 %v76
    %v751 = vpop.f32.mrb[0].mxu0
    %v752 = vadd.f32 %v712, %v751
    %v753 = vpop.f32.mrb[0].mxu0
    %v754 = vpop.f32.mrb[0].mxu0
    %v755 = vpop.f32.mrb[0].mxu0
    %756 = vdwg.mxu0
    %v757 = vstv %s23
    %v758 = vmul.f32 %v752, %v757
    %vm759 = vcmask 74752
    %760 = vst.msk [vmem:[#allocation3] sm:$0x3] %vm759, %v758
    // Predicated region
    $region18: #{tpu_custom_call.1} parent=1 // pred_check
      _
    $region19: #{tpu_custom_call.1} parent=1 // pred_check_branch
      %762 = sbr.rel (0) target = $region21
    $region20: #{tpu_custom_call.1} parent=1 // pred_region
      %s764 = ssub.s32 32, 32
      %765 = vsyncadd [#allocation4], %s764
      %s767 = sshll.u32 [#allocation3], 4
      %s768 = int_to_ptr.vmem [resolvable:$true] %s767
      %770 = dma.vmem_to_hbm [thread:$0]  %s768, 32, %s4, [#allocation4]
    $region21: #{tpu_custom_call.1} parent=1 // pred_fallthru
      _
    // Predicated region
    $region22: #{tpu_custom_call.1} parent=1 // pred_check
      _
    $region23: #{tpu_custom_call.1} parent=1 // pred_check_branch
      %772 = sbr.rel (0) target = $region25
    $region24: #{tpu_custom_call.1} parent=1 // pred_region
      %773 = dma.done [#allocation4], 32
    $region25: #{tpu_custom_call.1} parent=1 // pred_fallthru
      _
    %774 = vsyncpa [#allocation4], 1

</llo_original>
